<compile_context>
chip_gen: v7x
topology: tpu7x:2x2x1
jax: 0.10.0
libtpu: 0.0.40
codegen_flags: <defaults>
</compile_context>

<pallas_src>
import jax
import jax.numpy as jnp
from jax import lax
from jax.experimental import pallas as pl
from jax.experimental.pallas import tpu as pltpu

MATMUL_DTYPE = jnp.bfloat16           # MXU operand dtype (accumulation stays f32)
VMEM_LIMIT = 32 * 1024 * 1024         # scoped VMEM budget (safe on v5e/v6e/v7x)


def _cdiv(a, b):
    return (a + b - 1) // b


# ----------------------------------------------------------------------------
# Pallas kernels
# ----------------------------------------------------------------------------
def _lin_relu_kernel(x_ref, w_ref, b_ref, o_ref):
    y = jnp.dot(x_ref[...].astype(w_ref.dtype), w_ref[...],
                preferred_element_type=jnp.float32)
    o_ref[...] = jnp.maximum(y + b_ref[...], 0.0)


def _egnn_layer_kernel(
    xr_ref, xc_ref, ea_ref, rel_ref, row_ref, x_ref, pos_ref,
    w1e_ref, b1e_ref, w2e_ref, b2e_ref,
    w1n_ref, b1n_ref, w2n_ref, b2n_ref,
    w1c_ref, coord_ref,
    nf_ref, pos_out_ref,
    acc_ref, cs_ref,
):
    e = pl.program_id(0)
    n_et = pl.num_programs(0)
    N, d = x_ref.shape
    TE = xr_ref.shape[0]
    cdt = xr_ref.dtype  # bf16 compute dtype for MXU operands

    @pl.when(e == 0)
    def _init():
        acc_ref[...] = jnp.zeros_like(acc_ref)
        cs_ref[...] = jnp.zeros_like(cs_ref)

    # ---- edge MLP on this edge tile: Linear(2d+5, d) split over the concat --
    # (weights sliced in-kernel with static ref views; bf16 ops, f32 accum)
    h = (jnp.dot(xr_ref[...], w1e_ref[0:d, :], preferred_element_type=jnp.float32)
         + jnp.dot(xc_ref[...], w1e_ref[d:2 * d, :], preferred_element_type=jnp.float32)
         + jnp.dot(ea_ref[...], w1e_ref[2 * d:2 * d + 5, :], preferred_element_type=jnp.float32)
         + b1e_ref[...])
    h = jnp.maximum(h, 0.0)
    ef = (jnp.dot(h.astype(cdt), w2e_ref[...], preferred_element_type=jnp.float32)
          + b2e_ref[...])                                              # [TE, d] f32

    # ---- segment sum over edges: (N, TE) one-hot, last-dim MXU contraction --
    # padded edges carry row index == N -> all-zero one-hot column -> dropped.
    onehot = (lax.broadcasted_iota(jnp.int32, (N, TE), 0) == row_ref[...]).astype(cdt)
    acc_ref[...] += jnp.dot(onehot, ef.astype(cdt),
                            preferred_element_type=jnp.float32)        # [N, d]

    # ---- coord MLP: Linear(d,1) -> ReLU -> Linear(1,1) as VPU/XLU reductions -
    b1c = coord_ref[0]
    w2c = coord_ref[1]
    b2c = coord_ref[2]
    c1 = jnp.maximum(jnp.sum(ef * w1c_ref[...], axis=-1, keepdims=True) + b1c, 0.0)
    c2 = c1 * w2c + b2c                                                # [TE, 1]
    # padded edges have rel == 0 -> no contribution to the global coord sum.
    cs_ref[...] += jnp.sum(c2 * rel_ref[...], axis=0, keepdims=True)   # [1, 3]

    # ---- last edge tile: node MLP + broadcast coordinate update -------------
    @pl.when(e == n_et - 1)
    def _finalize():
        g = (jnp.dot(x_ref[...], w1n_ref[0:d, :], preferred_element_type=jnp.float32)
             + jnp.dot(acc_ref[...].astype(cdt), w1n_ref[d:2 * d, :],
                       preferred_element_type=jnp.float32)
             + b1n_ref[...])
        g = jnp.maximum(g, 0.0)
        nf_ref[...] = (jnp.dot(g.astype(cdt), w2n_ref[...],
                               preferred_element_type=jnp.float32) + b2n_ref[...])
        pos_out_ref[...] = pos_ref[...] + cs_ref[...]


def _readout_kernel(x_ref, batch_ref, w1_ref, b1_ref, w2t_ref, b2_ref,
                    o_ref, acc_ref):
    n = pl.program_id(0)
    B = acc_ref.shape[0]
    TN = x_ref.shape[0]
    cdt = x_ref.dtype

    @pl.when(n == 0)
    def _init():
        acc_ref[...] = jnp.zeros_like(acc_ref)

    # per-graph segment sum: (B, TN) one-hot, last-dim contraction.
    onehot = (lax.broadcasted_iota(jnp.int32, (B, TN), 0) == batch_ref[...]).astype(cdt)
    acc_ref[...] += jnp.dot(onehot, x_ref[...], preferred_element_type=jnp.float32)

    @pl.when(n == pl.num_programs(0) - 1)
    def _finalize():
        h = jnp.maximum(
            jnp.dot(acc_ref[...].astype(cdt), w1_ref[...],
                    preferred_element_type=jnp.float32) + b1_ref[...], 0.0)
        # lin2 (d -> 1) as a lane reduction instead of a 1-wide MXU matmul.
        o_ref[...] = jnp.sum(h * w2t_ref[...], axis=-1, keepdims=True) + b2_ref[0]


# ----------------------------------------------------------------------------
# pallas_call wrappers
# ----------------------------------------------------------------------------
def lin_relu(x, w, b, *, row_tile=256):
    assert row_tile % 8 == 0
    M, F = x.shape
    Dout = w.shape[1]
    n_t = max(1, _cdiv(M, row_tile))
    M_pad = n_t * row_tile
    xp = jnp.pad(x, ((0, M_pad - M), (0, 0)))
    wb = w.astype(MATMUL_DTYPE)
    out = pl.pallas_call(
        _lin_relu_kernel,
        grid=(n_t,),
        in_specs=[pl.BlockSpec((row_tile, F), lambda i: (i, 0)),
                  pl.BlockSpec((F, Dout), lambda i: (0, 0)),
                  pl.BlockSpec((1, Dout), lambda i: (0, 0))],
        out_specs=pl.BlockSpec((row_tile, Dout), lambda i: (i, 0)),
        out_shape=jax.ShapeDtypeStruct((M_pad, Dout), jnp.float32),
        compiler_params=pltpu.CompilerParams(
            dimension_semantics=("parallel",), vmem_limit_bytes=VMEM_LIMIT),
    )(xp, wb, b)
    return out[:M]


def egnn_layer(x, row, col, ea_p, rel_p, row_p, pos, lp, *, edge_tile):
    N, d = x.shape
    TE = edge_tile
    E_pad = row_p.shape[1]
    n_et = E_pad // TE
    E = row.shape[0]
    ep = E_pad - E

    # Data-dependent gathers stay as XLA glue between the per-layer kernels.
    # TODO(synk): fuse the x[row]/x[col] gathers in-kernel (scalar-prefetch
    # row/col + DMA gather) so node features never round-trip HBM per layer.
    xr = jnp.pad(x[row], ((0, ep), (0, 0))).astype(MATMUL_DTYPE)
    xc = jnp.pad(x[col], ((0, ep), (0, 0))).astype(MATMUL_DTYPE)
    xb = x.astype(MATMUL_DTYPE)

    w1e = lp["w1e"].astype(MATMUL_DTYPE)
    w2e = lp["w2e"].astype(MATMUL_DTYPE)
    w1n = lp["w1n"].astype(MATMUL_DTYPE)
    w2n = lp["w2n"].astype(MATMUL_DTYPE)
    w1c_t = lp["w1c"].reshape(1, d)                       # VPU lane-reduce path
    coord_s = jnp.concatenate(
        [lp["b1c"].reshape(-1), lp["w2c"].reshape(-1), lp["b2c"].reshape(-1)]
    )                                                     # [3] f32 -> SMEM

    edge2 = lambda e: (e, 0)
    const2 = lambda e: (0, 0)

    nf, pos_new = pl.pallas_call(
        _egnn_layer_kernel,
        grid=(n_et,),
        in_specs=[
            pl.BlockSpec((TE, d), edge2),               # xr   (edge tiled)
            pl.BlockSpec((TE, d), edge2),               # xc
            pl.BlockSpec((TE, 5), edge2),               # edge_attr
            pl.BlockSpec((TE, 3), edge2),               # rel
            pl.BlockSpec((1, TE), lambda e: (0, e)),    # row indices (lane tiled)
            pl.BlockSpec((N, d), const2),               # x   (resident)
            pl.BlockSpec((N, 3), const2),               # pos (resident)
            pl.BlockSpec((2 * d + 5, d), const2),       # w1e (whole, sliced in-kernel)
            pl.BlockSpec((1, d), const2),               # b1e
            pl.BlockSpec((d, d), const2),               # w2e
            pl.BlockSpec((1, d), const2),               # b2e
            pl.BlockSpec((2 * d, d), const2),           # w1n (whole)
            pl.BlockSpec((1, d), const2),               # b1n
            pl.BlockSpec((d, d), const2),               # w2n
            pl.BlockSpec((1, d), const2),               # b2n
            pl.BlockSpec((1, d), const2),               # w1c^T
            pl.BlockSpec(memory_space=pltpu.MemorySpace.SMEM),  # [b1c, w2c, b2c]
        ],
        out_specs=(pl.BlockSpec((N, d), const2),
                   pl.BlockSpec((N, 3), const2)),
        out_shape=(jax.ShapeDtypeStruct((N, d), jnp.float32),
                   jax.ShapeDtypeStruct((N, 3), jnp.float32)),
        scratch_shapes=[pltpu.VMEM((N, d), jnp.float32),   # per-node aggregation
                        pltpu.VMEM((1, 3), jnp.float32)],  # global coord-update sum
        compiler_params=pltpu.CompilerParams(
            dimension_semantics=("arbitrary",),
            vmem_limit_bytes=VMEM_LIMIT),
    )(xr, xc, ea_p, rel_p, row_p, xb, pos,
      w1e, lp["b1e"], w2e, lp["b2e"],
      w1n, lp["b1n"], w2n, lp["b2n"],
      w1c_t, coord_s)
    return nf, pos_new


def readout(x, batch, num_graphs, w1, b1, w2, b2, *, node_tile=128):
    assert node_tile % 128 == 0
    N, d = x.shape
    n_nt = max(1, _cdiv(N, node_tile))
    N_pad = n_nt * node_tile
    npad = N_pad - N
    xp = jnp.pad(x, ((0, npad), (0, 0))).astype(MATMUL_DTYPE)
    # padded nodes get batch index == num_graphs -> zero one-hot column.
    batch_p = jnp.pad(batch.astype(jnp.int32), (0, npad),
                      constant_values=num_graphs).reshape(1, N_pad)
    w1b = w1.astype(MATMUL_DTYPE)
    w2t = w2.reshape(1, d)              # f32, lane-reduce path
    b2s = b2.reshape(-1)                # [1] f32 -> SMEM

    out = pl.pallas_call(
        _readout_kernel,
        grid=(n_nt,),
        in_specs=[
            pl.BlockSpec((node_tile, d), lambda n: (n, 0)),
            pl.BlockSpec((1, node_tile), lambda n: (0, n)),
            pl.BlockSpec((d, d), lambda n: (0, 0)),
            pl.BlockSpec((1, d), lambda n: (0, 0)),
            pl.BlockSpec((1, d), lambda n: (0, 0)),
            pl.BlockSpec(memory_space=pltpu.MemorySpace.SMEM),
        ],
        out_specs=pl.BlockSpec((num_graphs, 1), lambda n: (0, 0)),
        out_shape=jax.ShapeDtypeStruct((num_graphs, 1), jnp.float32),
        scratch_shapes=[pltpu.VMEM((num_graphs, d), jnp.float32)],
        compiler_params=pltpu.CompilerParams(
            dimension_semantics=("arbitrary",),
            vmem_limit_bytes=VMEM_LIMIT),
    )(xp, batch_p, w1b, b1, w2t, b2s)
    return out.reshape(-1)


def egnn_forward(params, x_in, edge_index, edge_attr, pos, batch, num_graphs,
                 *, edge_tile=512, lin0_tile=256, readout_tile=128):
    assert edge_tile % 128 == 0
    N = x_in.shape[0]
    row = edge_index[0].astype(jnp.int32)
    col = edge_index[1].astype(jnp.int32)
    E = row.shape[0]
    n_et = max(1, _cdiv(E, edge_tile))
    E_pad = n_et * edge_tile
    ep = E_pad - E

    # Edge-constant slabs padded once.  Padded edges: row index = N (falls out
    # of the one-hot aggregation) and rel = 0 (falls out of the coord sum).
    ea_p = jnp.pad(edge_attr, ((0, ep), (0, 0))).astype(MATMUL_DTYPE)
    rel = pos[row] - pos[col]            # invariant across layers (broadcast pos update)
    rel_p = jnp.pad(rel, ((0, ep), (0, 0)))
    row_p = jnp.pad(row, (0, ep), constant_values=N).reshape(1, E_pad)

    x = lin_relu(x_in, params["lin0_w"], params["lin0_b"], row_tile=lin0_tile)
    for lp in params["layers"]:
        x, pos = egnn_layer(x, row, col, ea_p, rel_p, row_p, pos, lp,
                            edge_tile=edge_tile)
    out = readout(x, batch, num_graphs,
                  params["lin1_w"], params["lin1_b"],
                  params["lin2_w"], params["lin2_b"], node_tile=readout_tile)
    return out, pos


# ----------------------------------------------------------------------------
# Deterministic parameter init (PyTorch nn.Linear-style uniform)
# ----------------------------------------------------------------------------
def _linear_params(key, fan_in, fan_out):
    kw, kb = jax.random.split(key)
    bound = 1.0 / (fan_in ** 0.5)
    w = jax.random.uniform(kw, (fan_in, fan_out), jnp.float32, -bound, bound)
    b = jax.random.uniform(kb, (1, fan_out), jnp.float32, -bound, bound)
    return w, b


def init_params(key, num_features, dim):
    ks = iter(jax.random.split(key, 32))
    p = {}
    p["lin0_w"], p["lin0_b"] = _linear_params(next(ks), num_features, dim)
    layers = []
    for _ in range(3):
        lp = {}
        lp["w1e"], lp["b1e"] = _linear_params(next(ks), 2 * dim + 5, dim)
        lp["w2e"], lp["b2e"] = _linear_params(next(ks), dim, dim)
        lp["w1n"], lp["b1n"] = _linear_params(next(ks), 2 * dim, dim)
        lp["w2n"], lp["b2n"] = _linear_params(next(ks), dim, dim)
        lp["w1c"], lp["b1c"] = _linear_params(next(ks), dim, 1)
        lp["w2c"], lp["b2c"] = _linear_params(next(ks), 1, 1)
        layers.append(lp)
    p["layers"] = layers
    p["lin1_w"], p["lin1_b"] = _linear_params(next(ks), dim, dim)
    p["lin2_w"], p["lin2_b"] = _linear_params(next(ks), dim, 1)
    return p


# ----------------------------------------------------------------------------
# Pure-JAX reference: mirrors the PyTorch forward structure exactly, evaluated
# at the kernel's compute precision (bf16 MXU operands, f32 accumulation).
# ----------------------------------------------------------------------------
def _mm(a, w):
    return jnp.dot(a.astype(MATMUL_DTYPE), w.astype(MATMUL_DTYPE),
                   preferred_element_type=jnp.float32)


def ref_forward(params, x_in, edge_index, edge_attr, pos, batch, num_graphs):
    x = jnp.maximum(_mm(x_in, params["lin0_w"]) + params["lin0_b"], 0.0)
    row, col = edge_index[0], edge_index[1]
    N, d = x.shape
    for lp in params["layers"]:
        edge_input = jnp.concatenate([x[row], x[col], edge_attr], axis=1)
        h = jnp.maximum(_mm(edge_input, lp["w1e"]) + lp["b1e"], 0.0)
        ef = _mm(h, lp["w2e"]) + lp["b2e"]
        ef_q = ef.astype(MATMUL_DTYPE).astype(jnp.float32)  # MXU aggregation operand
        agg = jnp.zeros((N, d), jnp.float32).at[row].add(ef_q)
        node_input = jnp.concatenate([x, agg], axis=1)
        g = jnp.maximum(_mm(node_input, lp["w1n"]) + lp["b1n"], 0.0)
        nf = _mm(g, lp["w2n"]) + lp["b2n"]
        rel = pos[row] - pos[col]
        c1 = jnp.maximum(
            jnp.sum(ef * lp["w1c"].reshape(1, -1), axis=-1, keepdims=True)
            + lp["b1c"], 0.0)
        c2 = c1 * lp["w2c"] + lp["b2c"]
        pos = pos + jnp.sum(c2 * rel, axis=0, keepdims=True)
        x = nf
    x_q = x.astype(MATMUL_DTYPE).astype(jnp.float32)
    xg = jnp.zeros((num_graphs, d), jnp.float32).at[batch].add(x_q)
    h = jnp.maximum(_mm(xg, params["lin1_w"]) + params["lin1_b"], 0.0)
    out = (jnp.sum(h * params["lin2_w"].reshape(1, -1), axis=-1, keepdims=True)
           + params["lin2_b"])
    return out.reshape(-1), pos


# ----------------------------------------------------------------------------
if __name__ == "__main__":
    key = jax.random.PRNGKey(0)
    # nodes, edges, in-features, hidden dim, graphs
    N, E, F, D, B = 16, 200, 4, 32, 2

    keys = jax.random.split(key, 8)
    x_in = jax.random.normal(keys[0], (N, F), jnp.float32)
    pos = jax.random.normal(keys[1], (N, 3), jnp.float32)
    edge_attr = jax.random.normal(keys[2], (E, 5), jnp.float32)
    row = jax.random.randint(keys[3], (E,), 0, N, dtype=jnp.int32)
    col = jax.random.randint(keys[4], (E,), 0, N, dtype=jnp.int32)
    edge_index = jnp.stack([row, col], axis=0)
    batch = jnp.concatenate(
        [jnp.zeros(N // 2, jnp.int32), jnp.ones(N - N // 2, jnp.int32)])

    params = init_params(keys[5], F, D)

    # Small tiles in the demo so the edge grid has 2 tiles + a padded tail and
    # lin0 has 2 "parallel" tiles; use 512+ edge tiles at real graph sizes.
    out, pos_out = egnn_forward(
        params, x_in, edge_index, edge_attr, pos, batch, B,
        edge_tile=128, lin0_tile=8, readout_tile=128)
    out = jax.block_until_ready(out)

    ref_out, ref_pos = ref_forward(params, x_in, edge_index, edge_attr, pos,
                                   batch, B)
    assert out.shape == (B,), out.shape
    assert jnp.allclose(out, ref_out, atol=1e-2, rtol=1e-2), (out, ref_out)
    assert jnp.allclose(pos_out, ref_pos, atol=1e-2, rtol=1e-2)

    print("KERNEL_OK")
</pallas_src>

<mosaic_0001>
module attributes {stable_mosaic.version = 11 : i64} {
  func.func @_lin_relu_kernel(%arg0: i32, %arg1: memref<8x4xf32, #tpu.memory_space<vmem>>, %arg2: memref<4x32xbf16, #tpu.memory_space<vmem>>, %arg3: memref<1x32xf32, #tpu.memory_space<vmem>>, %arg4: memref<8x32xf32, #tpu.memory_space<vmem>>) attributes {dimension_semantics = [#tpu.dimension_semantics<parallel>], iteration_bounds = array<i64: 2>, scalar_prefetch = 0 : i64, scratch_operands = 0 : i64, tpu.core_type = #tpu.core_type<tc>, window_params = [{transform_indices = @transform_0, window_bounds = array<i64: 8, 4>}, {pipeline_mode = #tpu.pipeline_mode<synchronous>, transform_indices = @transform_1, window_bounds = array<i64: 4, 32>}, {pipeline_mode = #tpu.pipeline_mode<synchronous>, transform_indices = @transform_2, window_bounds = array<i64: 1, 32>}, {transform_indices = @transform_3, window_bounds = array<i64: 8, 32>}]} {
    %c0 = arith.constant 0 : index
    %c0_0 = arith.constant 0 : index
    %0 = vector.load %arg1[%c0, %c0_0] : memref<8x4xf32, #tpu.memory_space<vmem>>, vector<8x4xf32>
    %1 = arith.truncf %0 : vector<8x4xf32> to vector<8x4xbf16>
    %c0_1 = arith.constant 0 : index
    %c0_2 = arith.constant 0 : index
    %2 = vector.load %arg2[%c0_1, %c0_2] : memref<4x32xbf16, #tpu.memory_space<vmem>>, vector<4x32xbf16>
    %cst = arith.constant dense<0.000000e+00> : vector<8x32xf32>
    %3 = tpu.matmul %1, %2, %cst {dimension_numbers = #tpu.dot_dimension_numbers<[1], [0], [0], [1], [0, 0, 1, 1], [], []>} : vector<8x4xbf16>, vector<4x32xbf16>, vector<8x32xf32> -> vector<8x32xf32>
    %c0_3 = arith.constant 0 : index
    %c0_4 = arith.constant 0 : index
    %4 = vector.load %arg3[%c0_3, %c0_4] : memref<1x32xf32, #tpu.memory_space<vmem>>, vector<1x32xf32>
    %5 = vector.broadcast %4 : vector<1x32xf32> to vector<8x32xf32>
    %6 = arith.addf %3, %5 : vector<8x32xf32>
    %cst_5 = arith.constant 0.000000e+00 : f32
    %7 = vector.broadcast %cst_5 : f32 to vector<8x32xf32>
    %8 = arith.maximumf %6, %7 : vector<8x32xf32>
    %c0_6 = arith.constant 0 : index
    %c0_7 = arith.constant 0 : index
    %9 = vector.load %arg4[%c0_6, %c0_7] : memref<8x32xf32, #tpu.memory_space<vmem>>, vector<8x32xf32>
    tpu.vector_store %arg4[%c0_6, %c0_7], %8 {strides = array<i32>} : memref<8x32xf32, #tpu.memory_space<vmem>>, vector<8x32xf32>,
    return
  }
  func.func @transform_0(%arg0: i32) -> (i32, i32) {
    %c0_i32 = arith.constant 0 : i32
    %c0_i32_0 = arith.constant 0 : i32
    return %arg0, %c0_i32 : i32, i32
  }
  func.func @transform_1(%arg0: i32) -> (i32, i32) {
    %c0_i32 = arith.constant 0 : i32
    %c0_i32_0 = arith.constant 0 : i32
    %c0_i32_1 = arith.constant 0 : i32
    return %c0_i32, %c0_i32_0 : i32, i32
  }
  func.func @transform_2(%arg0: i32) -> (i32, i32) {
    %c0_i32 = arith.constant 0 : i32
    %c0_i32_0 = arith.constant 0 : i32
    %c0_i32_1 = arith.constant 0 : i32
    return %c0_i32, %c0_i32_0 : i32, i32
  }
  func.func @transform_3(%arg0: i32) -> (i32, i32) {
    %c0_i32 = arith.constant 0 : i32
    %c0_i32_0 = arith.constant 0 : i32
    return %arg0, %c0_i32 : i32, i32
  }
}

</mosaic_0001>

<llo_original>
// kernel: tpu_custom_call.1
$region0: #{tpu_custom_call.1}
  #allocation0 [shape = 'u32[]', space=smem, size = 0x4, offset = 0x4, fixed_abs, tag = 'smem constant byte address 0x4 - core index']
  #allocation1 [shape = 'u32[144,128]{1,0:T(1,128)}', space=vmem, size = 0x12000, scoped, tag = 'internal scratch']
  %s0 = inlined_call_operand.vmem [shape: f32[16,4], index: 0, kind: input, shape index: {}]
  %s1 = inlined_call_operand.vmem [shape: bf16[4,32], index: 1, kind: input, shape index: {}]
  %s2 = inlined_call_operand.vmem [shape: f32[1,32], index: 2, kind: input, shape index: {}]
  %s3 = inlined_call_operand.hbm [shape: f32[16,32], index: 3, kind: output, shape index: {}]
  %s4 = sld [smem:[#allocation0]]
  $region45: #{tpu_custom_call.1} parent=0
    _
  %s6 = ssub.s32 1, %s4
  %s7 = scalar_select 0, %s6, %s4
  $region1: #{tpu_custom_call.1} parent=0
    #allocation2 [shape = 'u8[8192]{0}', space=vmem, size = 0x2000, scoped, tag = 'output window, operand 0']
    #allocation3 [shape = 's32[2]{0}', space=sflag, size = 0x8, scoped, tag = 'scoped memory for tpu_custom_call.1']
    %8 = vsyncpa [#allocation3], 0
    %s9 = scalar_lea.sflag [#allocation3], 1
    %10 = vsyncpa %s9, 0
    loop: start=0, step=1, limit=4
    $region2: #{tpu_custom_call.1} parent=1 // loop_pre_header
      _
    $region3: #{tpu_custom_call.1} parent=1 // loop_header
      %s12 = sphi 0, %s16
      %p13 = scmp.ge.s32.totalorder %s12, 4
      %s22 = sphi 0, %s24
      %s25 = sphi 0, %s22
      %s26 = sphi 0, %s25
      %s42 = sphi 0, %s26
      %s46 = sphi 0, %s46
      %s48 = sphi 0, %s46
      %s49 = sphi 0, %s48
      %s63 = sphi 0, %s49
      %s67 = sphi 0, %s67
      %s69 = sphi 0, %s67
      %s70 = sphi 0, %s69
      %s84 = sphi 0, %s70
      %s90 = sphi 0, %s92
      %s93 = sphi 0, %s90
      %s94 = sphi 0, %s93
      %s110 = sphi 0, %s94
    $region4: #{tpu_custom_call.1} parent=1 // loop_header_branch
      %15 = sbr.rel (%p13) target = $region8
    $region5: #{tpu_custom_call.1} parent=1 // loop_body
      %s17 = ssub.s32 %s12, 1
      %s18 = ssub.s32 %s12, 2
      %s19 = sadd.s32 %s12, 1
      %s20 = ssub.s32 %s12, %s19
      %p21 = scmp.eq.s32.totalorder %s20, 0
      %s23 = sadd.s32 %s22, 1
      %s24 = scalar_select %p21, %s22, %s23
      %p27 = pneg %p21
      %p28 = scmp.eq.s32.totalorder %s12, 1
      %p29 = por %p27, %p28
      %p30 = scmp.ne.s32.totalorder %s22, %s25
      %p31 = scmp.eq.s32.totalorder %s12, 0
      %p32 = por %p30, %p31
      %p33 = scmp.ne.s32.totalorder %s22, %s25
      %p34 = scmp.eq.s32.totalorder %s17, 1
      %p35 = por %p33, %p34
      %p36 = scmp.ne.s32.totalorder %s25, %s26
      %p37 = scmp.eq.s32.totalorder %s17, 0
      %p38 = por %p36, %p37
      %p39 = scmp.ne.s32.totalorder %s25, %s26
      %p40 = scmp.eq.s32.totalorder %s18, 1
      %p41 = por %p39, %p40
      %p43 = scmp.ne.s32.totalorder %s26, %s42
      %p44 = scmp.eq.s32.totalorder %s18, 0
      %p45 = por %p43, %p44
      %s47 = sadd.s32 %s46, 1
      %p50 = scmp.eq.s32.totalorder %s12, 1
      %p51 = scmp.ne.s32.totalorder %s46, %s48
      %p52 = scmp.eq.s32.totalorder %s12, 0
      %p53 = por %p51, %p52
      %p54 = scmp.ne.s32.totalorder %s46, %s48
      %p55 = scmp.eq.s32.totalorder %s17, 1
      %p56 = por %p54, %p55
      %p57 = scmp.ne.s32.totalorder %s48, %s49
      %p58 = scmp.eq.s32.totalorder %s17, 0
      %p59 = por %p57, %p58
      %p60 = scmp.ne.s32.totalorder %s48, %s49
      %p61 = scmp.eq.s32.totalorder %s18, 1
      %p62 = por %p60, %p61
      %p64 = scmp.ne.s32.totalorder %s49, %s63
      %p65 = scmp.eq.s32.totalorder %s18, 0
      %p66 = por %p64, %p65
      %s68 = sadd.s32 %s67, 1
      %p71 = scmp.eq.s32.totalorder %s12, 1
      %p72 = scmp.ne.s32.totalorder %s67, %s69
      %p73 = scmp.eq.s32.totalorder %s12, 0
      %p74 = por %p72, %p73
      %p75 = scmp.ne.s32.totalorder %s67, %s69
      %p76 = scmp.eq.s32.totalorder %s17, 1
      %p77 = por %p75, %p76
      %p78 = scmp.ne.s32.totalorder %s69, %s70
      %p79 = scmp.eq.s32.totalorder %s17, 0
      %p80 = por %p78, %p79
      %p81 = scmp.ne.s32.totalorder %s69, %s70
      %p82 = scmp.eq.s32.totalorder %s18, 1
      %p83 = por %p81, %p82
      %p85 = scmp.ne.s32.totalorder %s70, %s84
      %p86 = scmp.eq.s32.totalorder %s18, 0
      %p87 = por %p85, %p86
      %s88 = ssub.s32 %s12, %s19
      %p89 = scmp.eq.s32.totalorder %s88, 0
      %s91 = sadd.s32 %s90, 1
      %s92 = scalar_select %p89, %s90, %s91
      %p95 = pneg %p89
      %p96 = scmp.eq.s32.totalorder %s12, 1
      %p97 = por %p95, %p96
      %p98 = scmp.ne.s32.totalorder %s90, %s93
      %p99 = scmp.eq.s32.totalorder %s12, 0
      %p100 = por %p98, %p99
      %p101 = scmp.ne.s32.totalorder %s90, %s93
      %p102 = scmp.eq.s32.totalorder %s17, 1
      %p103 = por %p101, %p102
      %p104 = scmp.ne.s32.totalorder %s93, %s94
      %p105 = scmp.eq.s32.totalorder %s17, 0
      %p106 = por %p104, %p105
      %p107 = scmp.ne.s32.totalorder %s93, %s94
      %p108 = scmp.eq.s32.totalorder %s18, 1
      %p109 = por %p107, %p108
      %p111 = scmp.ne.s32.totalorder %s94, %s110
      %p112 = scmp.eq.s32.totalorder %s18, 0
      %p113 = por %p111, %p112
      %p114 = scmp.le.s32.totalorder 1, %s12
      %p115 = scmp.lt.s32.totalorder %s12, 3
      %p116 = pnand %p114, %p115
      %p117 = pneg %p116
      // Predicated region
      $region9: #{tpu_custom_call.1} parent=5 // pred_check
        _
      $region10: #{tpu_custom_call.1} parent=5 // pred_check_branch
        %119 = sbr.rel (%p116) target = $region12
      $region11: #{tpu_custom_call.1} parent=5 // pred_region
        %s120 = ssub.s32 %s12, 1
        // Predicated region
        $region13: #{tpu_custom_call.1} parent=11 // pred_check
          %p121 = pneg %p59
        $region14: #{tpu_custom_call.1} parent=11 // pred_check_branch
          %123 = sbr.rel (%p121) target = $region16
        $region15: #{tpu_custom_call.1} parent=11 // pred_region
          _
        $region16: #{tpu_custom_call.1} parent=11 // pred_fallthru
          _
        // Predicated region
        $region17: #{tpu_custom_call.1} parent=11 // pred_check
          %p124 = pneg %p80
        $region18: #{tpu_custom_call.1} parent=11 // pred_check_branch
          %126 = sbr.rel (%p124) target = $region20
        $region19: #{tpu_custom_call.1} parent=11 // pred_region
          _
        $region20: #{tpu_custom_call.1} parent=11 // pred_fallthru
          _
      $region12: #{tpu_custom_call.1} parent=5 // pred_fallthru
        _
      %p127 = scmp.lt.s32.totalorder %s12, 2
      // Predicated region
      $region21: #{tpu_custom_call.1} parent=5 // pred_check
        %p128 = pneg %p127
      $region22: #{tpu_custom_call.1} parent=5 // pred_check_branch
        %130 = sbr.rel (%p128) target = $region24
      $region23: #{tpu_custom_call.1} parent=5 // pred_region
        // Predicated region
        $region25: #{tpu_custom_call.1} parent=23 // pred_check
          %p131 = pneg %p32
        $region26: #{tpu_custom_call.1} parent=23 // pred_check_branch
          %133 = sbr.rel (%p131) target = $region28
        $region27: #{tpu_custom_call.1} parent=23 // pred_region
          %p134 = scmp.lt.s32.totalorder %s12, 1
          %s135 = scalar_select %p134, %s12, 1
          %s136 = smul.addr %s135, 8
          %s137 = scalar_lea.vmem %s0, %s136
        $region28: #{tpu_custom_call.1} parent=23 // pred_fallthru
          _
      $region24: #{tpu_custom_call.1} parent=5 // pred_fallthru
        _
      %p138 = scmp.le.s32.totalorder 1, %s12
      %p139 = scmp.lt.s32.totalorder %s12, 3
      %p140 = pnand %p138, %p139
      %p141 = pneg %p140
      // Predicated region
      $region29: #{tpu_custom_call.1} parent=5 // pred_check
        _
      $region30: #{tpu_custom_call.1} parent=5 // pred_check_branch
        %143 = sbr.rel (%p140) target = $region32
      $region31: #{tpu_custom_call.1} parent=5 // pred_region
        %s144 = ssub.s32 %s12, 1
        %p145 = scmp.lt.s32.totalorder %s17, 1
        %s146 = scalar_select %p145, %s17, 1
        %s147 = smul.addr %s146, 8
        %s148 = scalar_lea.vmem %s0, %s147
        %p149 = pneg %p38
        %p150 = pneg %p35
        %p151 = pneg %p59
        %p152 = pneg %p56
        %p153 = pneg %p80
        %p154 = pneg %p77
        %p155 = pneg %p106
        %p156 = pneg %p103
        %s157 = sand.u32 %s93, 1
        %s158 = scalar_lea.sflag [#allocation3], %s157
        %s159 = sand.u32 %s93, 1
        %s160 = smul.addr %s159, 8
        %s161 = scalar_lea.vmem [#allocation2], %s160
        %p162 = scmp.lt.s32.totalorder %s17, 1
        %s163 = scalar_select %p162, %s17, 1
        %s164 = smul.addr %s163, 8
        %s165 = scalar_lea.vmem %s0, %s164
        %v167 = vld [vmem:[%s165] sm:$0xff]
        %v168 = vpack.c.bf16 %v167, %v167
        %v169 = vld [vmem:[%s1] sm:$0x3]
        %v170 = vld [vmem:[%s2] sm:$0x1]
        %v172 = vlaneseq
        %v173 = vshrl.u32 %v172, 7
        %v174 = vsub.s32 0, %v173
        %v175 = vrot.slane %v170, %v174
        %vm177 = vcmask 31744
        %v179 = vsel %vm177, %v168, 0
        %vm181 = vcmask 1041408
        %v183 = vsel %vm181, %v169, 0
        %185 = vmatprep.subr.bf16.mxu0 0
        %186 = vmatpush1.bf16.msra.mxu0 %v183
        %187 = vmatprep.subr.bf16.mxu0 0
        %188 = vmatpush1.bf16.msra.mxu0 0
        %189 = vmatprep.subr.bf16.mxu0 0
        %190 = vmatpush1.bf16.msra.mxu0 0
        %191 = vmatprep.subr.bf16.mxu0 0
        %192 = vmatpush1.bf16.msra.mxu0 0
        %193 = vmatprep.subr.bf16.mxu0 0
        %194 = vmatpush1.bf16.msra.mxu0 0
        %195 = vmatprep.subr.bf16.mxu0 0
        %196 = vmatpush1.bf16.msra.mxu0 0
        %197 = vmatprep.subr.bf16.mxu0 0
        %198 = vmatpush1.bf16.msra.mxu0 0
        %199 = vmatprep.subr.bf16.mxu0 0
        %200 = vmatpush1.bf16.msra.mxu0 0
        %201 = vmatprep.subr.bf16.mxu0 0
        %202 = vmatpush1.bf16.msra.mxu0 0
        %203 = vmatprep.subr.bf16.mxu0 0
        %204 = vmatpush1.bf16.msra.mxu0 0
        %205 = vmatprep.subr.bf16.mxu0 0
        %206 = vmatpush1.bf16.msra.mxu0 0
        %207 = vmatprep.subr.bf16.mxu0 0
        %208 = vmatpush1.bf16.msra.mxu0 0
        %209 = vmatprep.subr.bf16.mxu0 0
        %210 = vmatpush1.bf16.msra.mxu0 0
        %211 = vmatprep.subr.bf16.mxu0 0
        %212 = vmatpush1.bf16.msra.mxu0 0
        %213 = vmatprep.subr.bf16.mxu0 0
        %214 = vmatpush1.bf16.msra.mxu0 0
        %215 = vmatprep.subr.bf16.mxu0 0
        %216 = vmatpush1.bf16.msra.mxu0 0
        %217 = vmatprep.mubr.bf16.mxu0 0
        %218 = vmatmul.mubr.bf16.gmra.mrb[0].mxu0 %v179
        %v219 = vpop.f32.mrb[0].mxu0
        %v220 = vadd.f32 %v175, %v219
        %v221 = vpop.f32.mrb[0].mxu0
        %v222 = vpop.f32.mrb[0].mxu0
        %v223 = vpop.f32.mrb[0].mxu0
        %224 = vdwg.mxu0
        %v225 = vmax.f32 %v220, 0.0
        %vm226 = vcmask 261120
        %227 = vst.msk [vmem:[%s161] sm:$0xff] %vm226, %v225
        %s228 = sand.u32 %s93, 1
        %s229 = scalar_lea.sflag [#allocation3], %s228
        %s230 = sand.u32 %s93, 1
        %s231 = smul.addr %s230, 8
        %s232 = scalar_lea.vmem [#allocation2], %s231
        // Predicated region
        $region33: #{tpu_custom_call.1} parent=31 // pred_check
          %p233 = pneg %p103
        $region34: #{tpu_custom_call.1} parent=31 // pred_check_branch
          %235 = sbr.rel (%p233) target = $region36
        $region35: #{tpu_custom_call.1} parent=31 // pred_region
          %s237 = ssub.s32 128, 128
          %238 = vsyncadd %s229, %s237
          %s239 = smul.addr %s17, 128
          %s240 = scalar_lea.hbm %s3, %s239
          %s242 = sshll.u32 %s232, 4
          %s243 = int_to_ptr.vmem [resolvable:$true] %s242
          %245 = dma.vmem_to_hbm [thread:$0]  %s243, 128, %s240, %s229
        $region36: #{tpu_custom_call.1} parent=31 // pred_fallthru
          _
      $region32: #{tpu_custom_call.1} parent=5 // pred_fallthru
        _
      %p246 = scmp.le.s32.totalorder 2, %s12
      // Predicated region
      $region37: #{tpu_custom_call.1} parent=5 // pred_check
        %p247 = pneg %p246
      $region38: #{tpu_custom_call.1} parent=5 // pred_check_branch
        %249 = sbr.rel (%p247) target = $region40
      $region39: #{tpu_custom_call.1} parent=5 // pred_region
        %s250 = ssub.s32 %s12, 2
        // Predicated region
        $region41: #{tpu_custom_call.1} parent=39 // pred_check
          %p251 = pneg %p109
        $region42: #{tpu_custom_call.1} parent=39 // pred_check_branch
          %253 = sbr.rel (%p251) target = $region44
        $region43: #{tpu_custom_call.1} parent=39 // pred_region
          %s254 = sand.u32 %s94, 1
          %s255 = scalar_lea.sflag [#allocation3], %s254
          %s256 = sand.u32 %s94, 1
          %s257 = smul.addr %s256, 8
          %s258 = scalar_lea.vmem [#allocation2], %s257
          %259 = dma.done %s255, 128
        $region44: #{tpu_custom_call.1} parent=39 // pred_fallthru
          _
      $region40: #{tpu_custom_call.1} parent=5 // pred_fallthru
        _
    $region6: #{tpu_custom_call.1} parent=1 // loop_footer
      %s16 = sadd.s32 1, %s12
    $region7: #{tpu_custom_call.1} parent=1 // loop_footer_branch
      %11 = sbr.rel target = $region3
    $region8: #{tpu_custom_call.1} parent=1 // loop_exit
      _
    %260 = vsyncpa [#allocation3], 1
    %s261 = scalar_lea.sflag [#allocation3], 1
    %262 = vsyncpa %s261, 1

</llo_original>
